<compile_context>
chip_gen: v7x
topology: tpu7x:2x2x1
jax: 0.10.0
libtpu: 0.0.40
codegen_flags: <defaults>
</compile_context>

<pallas_src>
import jax
import jax.numpy as jnp
from jax.experimental import pallas as pl
from jax.experimental.pallas import tpu as pltpu


def _vmem_limit_bytes():
    try:
        cap = int(getattr(pltpu.get_tpu_info(), "vmem_capacity_bytes", 0))
    except Exception:
        cap = 0
    if cap <= 0:
        cap = 64 * 1024 * 1024  # conservative fallback (v7x per-TC VMEM)
    # Leave 25% headroom; cap at 64 MiB so we never exceed v7x's per-TC VMEM.
    return min((3 * cap) // 4, 64 * 1024 * 1024)


_VMEM_LIMIT = _vmem_limit_bytes()
# Per-input tile element budget: 2 inputs x 2 pipeline buffers (input dtype)
# plus ~3 f32 elementwise temporaries inside the kernel -> <= ~32 B/element
# with f32 inputs must fit under the VMEM limit.
_MAX_TILE_ELEMS = max(8 * 128, _VMEM_LIMIT // 32)


def _choose_blocks(n, h, w):
    """Pick (bn, bh): batch-block and row-block sizes.

    * bn * bh * w <= _MAX_TILE_ELEMS
    * bh is either the full H or a multiple of 8 (BlockSpec sublane rule)
    * >= 2 grid blocks whenever the problem allows (megacore sharding on v7x)
    """
    plane = h * w
    if plane <= _MAX_TILE_ELEMS:
        bh = h
        bn = max(1, min(n, _MAX_TILE_ELEMS // plane))
    else:
        # Single channel-0 plane doesn't fit: tile rows instead.
        bn = 1
        rows = max(8, ((_MAX_TILE_ELEMS // w) // 8) * 8)
        bh = min(rows, h)

    nb = pl.cdiv(n, bn)
    hb = pl.cdiv(h, bh)
    if nb * hb < 2:
        if n >= 2:
            bn = pl.cdiv(n, 2)
        elif h > 8:
            bh = min(h, max(8, ((pl.cdiv(h, 2) + 7) // 8) * 8))
            if bh >= h:
                bh = 8
    return bn, bh


def _make_dice_partial_kernel(n, h, bn, bh):
    mask_n = (n % bn) != 0
    mask_h = (h % bh) != 0

    def kernel(p_ref, t_ref, out_ref):
        # p_ref / t_ref: (bn, 1, bh, W) channel-0 tiles.
        p = p_ref[...].astype(jnp.float32)
        t = t_ref[...].astype(jnp.float32)

        if mask_n or mask_h:
            valid = None
            if mask_n:
                b_idx = (jax.lax.broadcasted_iota(jnp.int32, p.shape, 0)
                         + pl.program_id(0) * bn)
                valid = b_idx < n
            if mask_h:
                r_idx = (jax.lax.broadcasted_iota(jnp.int32, p.shape, 2)
                         + pl.program_id(1) * bh)
                v_h = r_idx < h
                valid = v_h if valid is None else (valid & v_h)
            p = jnp.where(valid, p, 0.0)
            t = jnp.where(valid, t, 0.0)

        s_pt = jnp.sum(p * t)
        s_p = jnp.sum(p)
        s_t = jnp.sum(t)

        # Single lane-dense (8,128) slab: scalars on sublanes 0..2.
        sub = jax.lax.broadcasted_iota(jnp.int32, (8, 128), 0)
        slab = jnp.where(sub == 0, s_pt,
               jnp.where(sub == 1, s_p,
               jnp.where(sub == 2, s_t, 0.0)))
        out_ref[0, 0] = slab

    return kernel


def _dice_partial_sums(y_pred, y_true):
    n, c, h, w = y_pred.shape
    itemsize = jnp.dtype(y_pred.dtype).itemsize
    bn, bh = _choose_blocks(n, h, w)
    nb = pl.cdiv(n, bn)
    hb = pl.cdiv(h, bh)

    # Channel 0 selected directly by the BlockSpec (channel block size 1 at
    # block index 0). Last block dim equals the full W; bh is full H or a
    # multiple of 8, satisfying the (8, 128) rule.
    in_spec = pl.BlockSpec((bn, 1, bh, w), lambda i, j: (i, 0, j, 0))
    out_spec = pl.BlockSpec((1, 1, 8, 128), lambda i, j: (i, j, 0, 0))

    out_bytes = nb * hb * 8 * 128 * 4
    cost = pl.CostEstimate(
        flops=3 * n * h * w,
        transcendentals=0,
        bytes_accessed=2 * n * h * w * itemsize + out_bytes,
    )

    return pl.pallas_call(
        _make_dice_partial_kernel(n, h, bn, bh),
        out_shape=jax.ShapeDtypeStruct((nb, hb, 8, 128), jnp.float32),
        grid_spec=pltpu.PrefetchScalarGridSpec(
            num_scalar_prefetch=0,
            grid=(nb, hb),
            in_specs=[in_spec, in_spec],
            out_specs=out_spec,
        ),
        compiler_params=pltpu.CompilerParams(
            dimension_semantics=("parallel", "parallel"),
            vmem_limit_bytes=_VMEM_LIMIT,
        ),
        cost_estimate=cost,
    )(y_pred, y_true)


def dice_loss(y_pred, y_true, smooth=1.0):
    """Pallas implementation of DiceLoss.forward (channel-0 dice, NCHW)."""
    assert y_pred.shape == y_true.shape
    partials = _dice_partial_sums(y_pred, y_true)          # (nb, hb, 8, 128)
    sums = jnp.sum(partials[:, :, 0:3, 0], axis=(0, 1))    # (3,)
    intersection, p_sum, t_sum = sums[0], sums[1], sums[2]
    dsc = (2.0 * intersection + smooth) / (p_sum + t_sum + smooth)
    return 1.0 - dsc


def _dice_loss_ref(y_pred, y_true, smooth=1.0):
    p = y_pred[:, 0].reshape(-1).astype(jnp.float32)
    t = y_true[:, 0].reshape(-1).astype(jnp.float32)
    inter = jnp.sum(p * t)
    return 1.0 - (2.0 * inter + smooth) / (jnp.sum(p) + jnp.sum(t) + smooth)


if __name__ == "__main__":
    key = jax.random.PRNGKey(0)

    # Primary case: batch=2, channels=4, spatial=16x16 (even tiling path).
    k1, k2, k3, k4 = jax.random.split(key, 4)
    y_pred = jax.nn.sigmoid(jax.random.normal(k1, (2, 4, 16, 16), jnp.float32))
    y_true = (jax.random.uniform(k2, (2, 4, 16, 16)) > 0.5).astype(jnp.float32)
    loss = jax.block_until_ready(dice_loss(y_pred, y_true))
    ref = jax.block_until_ready(_dice_loss_ref(y_pred, y_true))
    assert jnp.allclose(loss, ref, rtol=1e-5, atol=1e-6), (loss, ref)

    # Ragged case: batch=3 (doesn't divide evenly) exercises the masked tail.
    y_pred2 = jax.nn.sigmoid(jax.random.normal(k3, (3, 4, 20, 16), jnp.float32))
    y_true2 = (jax.random.uniform(k4, (3, 4, 20, 16)) > 0.5).astype(jnp.float32)
    loss2 = jax.block_until_ready(dice_loss(y_pred2, y_true2))
    ref2 = jax.block_until_ready(_dice_loss_ref(y_pred2, y_true2))
    assert jnp.allclose(loss2, ref2, rtol=1e-5, atol=1e-6), (loss2, ref2)

    print("KERNEL_OK")
</pallas_src>

<mosaic_0001>
module attributes {stable_mosaic.version = 11 : i64} {
  func.func @kernel(%arg0: i32, %arg1: i32, %arg2: memref<1x1x16x16xf32, #tpu.memory_space<vmem>>, %arg3: memref<1x1x16x16xf32, #tpu.memory_space<vmem>>, %arg4: memref<1x1x8x128xf32, #tpu.memory_space<vmem>>) attributes {dimension_semantics = [#tpu.dimension_semantics<parallel>, #tpu.dimension_semantics<parallel>], iteration_bounds = array<i64: 2, 1>, scalar_prefetch = 0 : i64, scratch_operands = 0 : i64, tpu.core_type = #tpu.core_type<tc>, window_params = [{transform_indices = @transform_0, window_bounds = array<i64: 1, 1, 16, 16>}, {transform_indices = @transform_1, window_bounds = array<i64: 1, 1, 16, 16>}, {transform_indices = @transform_2, window_bounds = array<i64: 1, 1, 8, 128>}]} {
    %c0 = arith.constant 0 : index
    %c0_0 = arith.constant 0 : index
    %c0_1 = arith.constant 0 : index
    %c0_2 = arith.constant 0 : index
    %0 = vector.load %arg2[%c0, %c0_0, %c0_1, %c0_2] : memref<1x1x16x16xf32, #tpu.memory_space<vmem>>, vector<1x1x16x16xf32>
    %c0_3 = arith.constant 0 : index
    %c0_4 = arith.constant 0 : index
    %c0_5 = arith.constant 0 : index
    %c0_6 = arith.constant 0 : index
    %1 = vector.load %arg3[%c0_3, %c0_4, %c0_5, %c0_6] : memref<1x1x16x16xf32, #tpu.memory_space<vmem>>, vector<1x1x16x16xf32>
    %2 = arith.mulf %0, %1 : vector<1x1x16x16xf32>
    %3 = vector.shape_cast %2 : vector<1x1x16x16xf32> to vector<1x1x1x16x16xf32>
    %cst = arith.constant dense<0.000000e+00> : vector<1xf32>
    %4 = vector.multi_reduction <add>, %3, %cst [1, 2, 3, 4] : vector<1x1x1x16x16xf32> to vector<1xf32>
    %5 = vector.shape_cast %4 : vector<1xf32> to vector<1x1x1x1x1xf32>
    %6 = vector.extract %5[0, 0, 0, 0, 0] : f32 from vector<1x1x1x1x1xf32>
    %7 = vector.shape_cast %0 : vector<1x1x16x16xf32> to vector<1x1x1x16x16xf32>
    %cst_7 = arith.constant dense<0.000000e+00> : vector<1xf32>
    %8 = vector.multi_reduction <add>, %7, %cst_7 [1, 2, 3, 4] : vector<1x1x1x16x16xf32> to vector<1xf32>
    %9 = vector.shape_cast %8 : vector<1xf32> to vector<1x1x1x1x1xf32>
    %10 = vector.extract %9[0, 0, 0, 0, 0] : f32 from vector<1x1x1x1x1xf32>
    %11 = vector.shape_cast %1 : vector<1x1x16x16xf32> to vector<1x1x1x16x16xf32>
    %cst_8 = arith.constant dense<0.000000e+00> : vector<1xf32>
    %12 = vector.multi_reduction <add>, %11, %cst_8 [1, 2, 3, 4] : vector<1x1x1x16x16xf32> to vector<1xf32>
    %13 = vector.shape_cast %12 : vector<1xf32> to vector<1x1x1x1x1xf32>
    %14 = vector.extract %13[0, 0, 0, 0, 0] : f32 from vector<1x1x1x1x1xf32>
    %15 = tpu.iota {dimensions = array<i32: 0>} : vector<8x128xi32>
    %c0_i32 = arith.constant 0 : i32
    %16 = vector.broadcast %c0_i32 : i32 to vector<8x128xi32>
    %17 = arith.cmpi eq, %15, %16 : vector<8x128xi32>
    %c1_i32 = arith.constant 1 : i32
    %18 = vector.broadcast %c1_i32 : i32 to vector<8x128xi32>
    %19 = arith.cmpi eq, %15, %18 : vector<8x128xi32>
    %c2_i32 = arith.constant 2 : i32
    %20 = vector.broadcast %c2_i32 : i32 to vector<8x128xi32>
    %21 = arith.cmpi eq, %15, %20 : vector<8x128xi32>
    %cst_9 = arith.constant 0.000000e+00 : f32
    %22 = vector.broadcast %14 : f32 to vector<8x128xf32>
    %23 = vector.broadcast %cst_9 : f32 to vector<8x128xf32>
    %24 = arith.select %21, %22, %23 : vector<8x128xi1>, vector<8x128xf32>
    %25 = vector.broadcast %10 : f32 to vector<8x128xf32>
    %26 = arith.select %19, %25, %24 : vector<8x128xi1>, vector<8x128xf32>
    %27 = vector.broadcast %6 : f32 to vector<8x128xf32>
    %28 = arith.select %17, %27, %26 : vector<8x128xi1>, vector<8x128xf32>
    %c0_10 = arith.constant 0 : index
    %c0_11 = arith.constant 0 : index
    %c0_12 = arith.constant 0 : index
    %c0_13 = arith.constant 0 : index
    %29 = vector.load %arg4[%c0_10, %c0_11, %c0_12, %c0_13] : memref<1x1x8x128xf32, #tpu.memory_space<vmem>>, vector<1x1x8x128xf32>
    %30 = vector.shape_cast %29 : vector<1x1x8x128xf32> to vector<8x128xf32>
    %31 = vector.shape_cast %28 : vector<8x128xf32> to vector<1x1x8x128xf32>
    tpu.vector_store %arg4[%c0_10, %c0_11, %c0_12, %c0_13], %31 {strides = array<i32>} : memref<1x1x8x128xf32, #tpu.memory_space<vmem>>, vector<1x1x8x128xf32>,
    return
  }
  func.func @transform_0(%arg0: i32, %arg1: i32) -> (i32, i32, i32, i32) {
    %c0_i32 = arith.constant 0 : i32
    %c0_i32_0 = arith.constant 0 : i32
    %c0_i32_1 = arith.constant 0 : i32
    return %arg0, %c0_i32, %arg1, %c0_i32_0 : i32, i32, i32, i32
  }
  func.func @transform_1(%arg0: i32, %arg1: i32) -> (i32, i32, i32, i32) {
    %c0_i32 = arith.constant 0 : i32
    %c0_i32_0 = arith.constant 0 : i32
    %c0_i32_1 = arith.constant 0 : i32
    return %arg0, %c0_i32, %arg1, %c0_i32_0 : i32, i32, i32, i32
  }
  func.func @transform_2(%arg0: i32, %arg1: i32) -> (i32, i32, i32, i32) {
    %c0_i32 = arith.constant 0 : i32
    %c0_i32_0 = arith.constant 0 : i32
    %c0_i32_1 = arith.constant 0 : i32
    return %arg0, %arg1, %c0_i32, %c0_i32_0 : i32, i32, i32, i32
  }
}

</mosaic_0001>

<llo_original>
// kernel: tpu_custom_call.1
$region0: #{tpu_custom_call.1}
  #allocation0 [shape = 'u32[]', space=smem, size = 0x4, offset = 0x4, fixed_abs, tag = 'smem constant byte address 0x4 - core index']
  #allocation1 [shape = 'u32[144,128]{1,0:T(1,128)}', space=vmem, size = 0x12000, scoped, tag = 'internal scratch']
  %s0 = inlined_call_operand.hbm [shape: f32[2,4,16,16], index: 0, kind: input, shape index: {}]
  %s1 = inlined_call_operand.hbm [shape: f32[2,4,16,16], index: 1, kind: input, shape index: {}]
  %s2 = inlined_call_operand.hbm [shape: f32[2,1,8,128], index: 2, kind: output, shape index: {}]
  %s3 = sld [smem:[#allocation0]]
  $region49: #{tpu_custom_call.1} parent=0
    _
  %s5 = ssub.s32 1, %s3
  %s6 = scalar_select 0, %s5, %s3
  $region1: #{tpu_custom_call.1} parent=0
    #allocation2 [shape = 'u8[16384]{0}', space=vmem, size = 0x4000, scoped, tag = 'input window, operand 0']
    #allocation3 [shape = 's32[2]{0}', space=sflag, size = 0x8, scoped, tag = 'scoped memory for tpu_custom_call.1']
    #allocation4 [shape = 's32[2]{0}', space=sflag, size = 0x8, scoped, tag = 'scoped memory for tpu_custom_call.1']
    #allocation5 [shape = 'u8[16384]{0}', space=vmem, size = 0x4000, scoped, tag = 'input window, operand 1']
    #allocation6 [shape = 's32[2]{0}', space=sflag, size = 0x8, scoped, tag = 'scoped memory for tpu_custom_call.1']
    #allocation7 [shape = 'u8[8192]{0}', space=vmem, size = 0x2000, scoped, tag = 'output window, operand 0']
    %7 = vsyncpa [#allocation3], 0
    %s8 = scalar_lea.sflag [#allocation3], 1
    %9 = vsyncpa %s8, 0
    %10 = vsyncpa [#allocation6], 0
    %s11 = scalar_lea.sflag [#allocation6], 1
    %12 = vsyncpa %s11, 0
    %13 = vsyncpa [#allocation4], 0
    %s14 = scalar_lea.sflag [#allocation4], 1
    %15 = vsyncpa %s14, 0
    loop: start=0, step=1, limit=4
    $region2: #{tpu_custom_call.1} parent=1 // loop_pre_header
      _
    $region3: #{tpu_custom_call.1} parent=1 // loop_header
      %s17 = sphi 0, %s21
      %p18 = scmp.ge.s32.totalorder %s17, 4
      %s24 = sphi 0, %s36
      %s25 = sphi 0, %s32
      %s26 = sphi 0, %s24
      %s27 = sphi 0, %s25
      %s28 = sphi 0, %s26
      %s29 = sphi 0, %s27
      %s41 = sphi 0, %s43
      %s44 = sphi 0, %s41
      %s45 = sphi 0, %s44
      %s61 = sphi 0, %s45
      %s69 = sphi 0, %s71
      %s72 = sphi 0, %s69
      %s73 = sphi 0, %s72
      %s89 = sphi 0, %s73
      %s97 = sphi 0, %s99
      %s100 = sphi 0, %s97
      %s101 = sphi 0, %s100
      %s117 = sphi 0, %s101
    $region4: #{tpu_custom_call.1} parent=1 // loop_header_branch
      %20 = sbr.rel (%p18) target = $region8
    $region5: #{tpu_custom_call.1} parent=1 // loop_body
      %s22 = ssub.s32 %s17, 1
      %s23 = ssub.s32 %s17, 2
      %s30 = sadd.s32 1, %s25
      %p31 = scmp.ge.s32.totalorder %s30, 1
      %s32 = scalar_select %p31, 0, %s30
      %s33 = sadd.s32 1, %s24
      %s34 = scalar_select %p31, %s33, %s24
      %p35 = scmp.ge.s32.totalorder %s34, 2
      %s36 = scalar_select %p35, 0, %s34
      %s37 = ssub.s32 %s24, %s36
      %s38 = ssub.s32 %s25, %s32
      %s39 = sor.u32 %s37, %s38
      %p40 = scmp.eq.s32.totalorder %s39, 0
      %s42 = sadd.s32 %s41, 1
      %s43 = scalar_select %p40, %s41, %s42
      %p46 = pneg %p40
      %p47 = scmp.eq.s32.totalorder %s17, 1
      %p48 = por %p46, %p47
      %p49 = scmp.ne.s32.totalorder %s41, %s44
      %p50 = scmp.eq.s32.totalorder %s17, 0
      %p51 = por %p49, %p50
      %p52 = scmp.ne.s32.totalorder %s41, %s44
      %p53 = scmp.eq.s32.totalorder %s22, 1
      %p54 = por %p52, %p53
      %p55 = scmp.ne.s32.totalorder %s44, %s45
      %p56 = scmp.eq.s32.totalorder %s22, 0
      %p57 = por %p55, %p56
      %p58 = scmp.ne.s32.totalorder %s44, %s45
      %p59 = scmp.eq.s32.totalorder %s23, 1
      %p60 = por %p58, %p59
      %p62 = scmp.ne.s32.totalorder %s45, %s61
      %p63 = scmp.eq.s32.totalorder %s23, 0
      %p64 = por %p62, %p63
      %s65 = ssub.s32 %s24, %s36
      %s66 = ssub.s32 %s25, %s32
      %s67 = sor.u32 %s65, %s66
      %p68 = scmp.eq.s32.totalorder %s67, 0
      %s70 = sadd.s32 %s69, 1
      %s71 = scalar_select %p68, %s69, %s70
      %p74 = pneg %p68
      %p75 = scmp.eq.s32.totalorder %s17, 1
      %p76 = por %p74, %p75
      %p77 = scmp.ne.s32.totalorder %s69, %s72
      %p78 = scmp.eq.s32.totalorder %s17, 0
      %p79 = por %p77, %p78
      %p80 = scmp.ne.s32.totalorder %s69, %s72
      %p81 = scmp.eq.s32.totalorder %s22, 1
      %p82 = por %p80, %p81
      %p83 = scmp.ne.s32.totalorder %s72, %s73
      %p84 = scmp.eq.s32.totalorder %s22, 0
      %p85 = por %p83, %p84
      %p86 = scmp.ne.s32.totalorder %s72, %s73
      %p87 = scmp.eq.s32.totalorder %s23, 1
      %p88 = por %p86, %p87
      %p90 = scmp.ne.s32.totalorder %s73, %s89
      %p91 = scmp.eq.s32.totalorder %s23, 0
      %p92 = por %p90, %p91
      %s93 = ssub.s32 %s24, %s36
      %s94 = ssub.s32 %s25, %s32
      %s95 = sor.u32 %s93, %s94
      %p96 = scmp.eq.s32.totalorder %s95, 0
      %s98 = sadd.s32 %s97, 1
      %s99 = scalar_select %p96, %s97, %s98
      %p102 = pneg %p96
      %p103 = scmp.eq.s32.totalorder %s17, 1
      %p104 = por %p102, %p103
      %p105 = scmp.ne.s32.totalorder %s97, %s100
      %p106 = scmp.eq.s32.totalorder %s17, 0
      %p107 = por %p105, %p106
      %p108 = scmp.ne.s32.totalorder %s97, %s100
      %p109 = scmp.eq.s32.totalorder %s22, 1
      %p110 = por %p108, %p109
      %p111 = scmp.ne.s32.totalorder %s100, %s101
      %p112 = scmp.eq.s32.totalorder %s22, 0
      %p113 = por %p111, %p112
      %p114 = scmp.ne.s32.totalorder %s100, %s101
      %p115 = scmp.eq.s32.totalorder %s23, 1
      %p116 = por %p114, %p115
      %p118 = scmp.ne.s32.totalorder %s101, %s117
      %p119 = scmp.eq.s32.totalorder %s23, 0
      %p120 = por %p118, %p119
      %p121 = scmp.le.s32.totalorder 1, %s17
      %p122 = scmp.lt.s32.totalorder %s17, 3
      %p123 = pnand %p121, %p122
      %p124 = pneg %p123
      // Predicated region
      $region9: #{tpu_custom_call.1} parent=5 // pred_check
        _
      $region10: #{tpu_custom_call.1} parent=5 // pred_check_branch
        %126 = sbr.rel (%p123) target = $region12
      $region11: #{tpu_custom_call.1} parent=5 // pred_region
        %s127 = ssub.s32 %s17, 1
      $region12: #{tpu_custom_call.1} parent=5 // pred_fallthru
        _
      %p128 = scmp.lt.s32.totalorder %s17, 2
      // Predicated region
      $region13: #{tpu_custom_call.1} parent=5 // pred_check
        %p129 = pneg %p128
      $region14: #{tpu_custom_call.1} parent=5 // pred_check_branch
        %131 = sbr.rel (%p129) target = $region16
      $region15: #{tpu_custom_call.1} parent=5 // pred_region
        // Predicated region
        $region17: #{tpu_custom_call.1} parent=15 // pred_check
          %p132 = pneg %p51
        $region18: #{tpu_custom_call.1} parent=15 // pred_check_branch
          %134 = sbr.rel (%p132) target = $region20
        $region19: #{tpu_custom_call.1} parent=15 // pred_region
          %s135 = sand.u32 %s41, 1
          %s136 = scalar_lea.sflag [#allocation3], %s135
          %s137 = sand.u32 %s41, 1
          %s138 = smul.addr %s137, 16
          %s139 = scalar_lea.vmem [#allocation2], %s138
          %s140 = smul.u32 2, %s25
          %s142 = ssub.s32 256, 256
          %143 = vsyncadd %s136, %s142
          %s144 = smul.addr %s24, 8
          %s145 = sadd.s32 %s140, %s144
          %s146 = smul.addr %s145, 128
          %s147 = scalar_lea.hbm %s0, %s146
          %s148 = sshll.u32 %s139, 4
          %s149 = int_to_ptr.vmem [resolvable:$true] %s148
          %154 = dma.hbm_to_vmem [thread:$0]  %s147, 256, %s149, %s136, 128, 128, 8
        $region20: #{tpu_custom_call.1} parent=15 // pred_fallthru
          _
        // Predicated region
        $region21: #{tpu_custom_call.1} parent=15 // pred_check
          %p155 = pneg %p79
        $region22: #{tpu_custom_call.1} parent=15 // pred_check_branch
          %157 = sbr.rel (%p155) target = $region24
        $region23: #{tpu_custom_call.1} parent=15 // pred_region
          %s158 = sand.u32 %s69, 1
          %s159 = scalar_lea.sflag [#allocation6], %s158
          %s160 = sand.u32 %s69, 1
          %s161 = smul.addr %s160, 16
          %s162 = scalar_lea.vmem [#allocation5], %s161
          %s163 = smul.u32 2, %s25
          %s165 = ssub.s32 256, 256
          %166 = vsyncadd %s159, %s165
          %s167 = smul.addr %s24, 8
          %s168 = sadd.s32 %s163, %s167
          %s169 = smul.addr %s168, 128
          %s170 = scalar_lea.hbm %s1, %s169
          %s171 = sshll.u32 %s162, 4
          %s172 = int_to_ptr.vmem [resolvable:$true] %s171
          %177 = dma.hbm_to_vmem [thread:$0]  %s170, 256, %s172, %s159, 128, 128, 8
        $region24: #{tpu_custom_call.1} parent=15 // pred_fallthru
          _
      $region16: #{tpu_custom_call.1} parent=5 // pred_fallthru
        _
      %p178 = scmp.le.s32.totalorder 1, %s17
      %p179 = scmp.lt.s32.totalorder %s17, 3
      %p180 = pnand %p178, %p179
      %p181 = pneg %p180
      // Predicated region
      $region25: #{tpu_custom_call.1} parent=5 // pred_check
        _
      $region26: #{tpu_custom_call.1} parent=5 // pred_check_branch
        %183 = sbr.rel (%p180) target = $region28
      $region27: #{tpu_custom_call.1} parent=5 // pred_region
        %s184 = ssub.s32 %s17, 1
        %s185 = sand.u32 %s44, 1
        %s186 = scalar_lea.sflag [#allocation3], %s185
        %s187 = sand.u32 %s44, 1
        %s188 = smul.addr %s187, 16
        %s189 = scalar_lea.vmem [#allocation2], %s188
        // Predicated region
        $region29: #{tpu_custom_call.1} parent=27 // pred_check
          %p190 = pneg %p57
        $region30: #{tpu_custom_call.1} parent=27 // pred_check_branch
          %192 = sbr.rel (%p190) target = $region32
        $region31: #{tpu_custom_call.1} parent=27 // pred_region
          %193 = dma.done %s186, 256
        $region32: #{tpu_custom_call.1} parent=27 // pred_fallthru
          _
        %s194 = sand.u32 %s72, 1
        %s195 = scalar_lea.sflag [#allocation6], %s194
        %s196 = sand.u32 %s72, 1
        %s197 = smul.addr %s196, 16
        %s198 = scalar_lea.vmem [#allocation5], %s197
        // Predicated region
        $region33: #{tpu_custom_call.1} parent=27 // pred_check
          %p199 = pneg %p85
        $region34: #{tpu_custom_call.1} parent=27 // pred_check_branch
          %201 = sbr.rel (%p199) target = $region36
        $region35: #{tpu_custom_call.1} parent=27 // pred_region
          %202 = dma.done %s195, 256
        $region36: #{tpu_custom_call.1} parent=27 // pred_fallthru
          _
        %s203 = sand.u32 %s44, 1
        %s204 = scalar_lea.sflag [#allocation3], %s203
        %s205 = sand.u32 %s44, 1
        %s206 = smul.addr %s205, 16
        %s207 = scalar_lea.vmem [#allocation2], %s206
        %p208 = pneg %p57
        %p209 = pneg %p54
        %s210 = sand.u32 %s72, 1
        %s211 = scalar_lea.sflag [#allocation6], %s210
        %s212 = sand.u32 %s72, 1
        %s213 = smul.addr %s212, 16
        %s214 = scalar_lea.vmem [#allocation5], %s213
        %p215 = pneg %p85
        %p216 = pneg %p82
        %p217 = pneg %p113
        %p218 = pneg %p110
        %s219 = sand.u32 %s100, 1
        %s220 = scalar_lea.sflag [#allocation4], %s219
        %s221 = sand.u32 %s100, 1
        %s222 = smul.addr %s221, 8
        %s223 = scalar_lea.vmem [#allocation7], %s222
        %s224 = smul.u32 2, %s27
        %s225 = smul.u32 2, %s27
        %v226 = vld [vmem:[%s189] sm:$0xff]
        %v227 = vld [vmem:[%s189 + $0x8] sm:$0xff]
        %v228 = vld [vmem:[%s198] sm:$0xff]
        %v229 = vld [vmem:[%s198 + $0x8] sm:$0xff]
        %v230 = vmul.f32 %v226, %v228
        %v231 = vmul.f32 %v227, %v229
        %vm232 = vcmask 130048
        %v233 = vsel %vm232, %v230, 0.0
        %v234 = vsel %vm232, %v231, 0.0
        %v235 = vadd.f32 %v233, %v234
        %236 = vadd.xlane.f32.xlu0 %v235
        %v237 = vpop.xlane.xlu0 %236
        %v238 = vrot.slane %v237, 4
        %v239 = vadd.f32 %v237, %v238
        %v240 = vrot.slane %v239, 2
        %v241 = vadd.f32 %v239, %v240
        %v242 = vrot.slane %v241, 1
        %v243 = vadd.f32 %v241, %v242
        %s244 = vtos %v243
        %v245 = vsel %vm232, %v226, 0.0
        %v246 = vsel %vm232, %v227, 0.0
        %v247 = vadd.f32 %v245, %v246
        %248 = vadd.xlane.f32.xlu0 %v247
        %v249 = vpop.xlane.xlu0 %248
        %v250 = vrot.slane %v249, 4
        %v251 = vadd.f32 %v249, %v250
        %v252 = vrot.slane %v251, 2
        %v253 = vadd.f32 %v251, %v252
        %v254 = vrot.slane %v253, 1
        %v255 = vadd.f32 %v253, %v254
        %s256 = vtos %v255
        %v257 = vsel %vm232, %v228, 0.0
        %v258 = vsel %vm232, %v229, 0.0
        %v259 = vadd.f32 %v257, %v258
        %260 = vadd.xlane.f32.xlu0 %v259
        %v261 = vpop.xlane.xlu0 %260
        %v262 = vrot.slane %v261, 4
        %v263 = vadd.f32 %v261, %v262
        %v264 = vrot.slane %v263, 2
        %v265 = vadd.f32 %v263, %v264
        %v266 = vrot.slane %v265, 1
        %v267 = vadd.f32 %v265, %v266
        %s268 = vtos %v267
        %v269 = vlaneseq
        %v270 = vshrl.u32 %v269, 7
        %vm271 = vcmp.eq.s32.totalorder %v270, 0
        %vm272 = vcmp.eq.s32.totalorder %v270, 1
        %vm273 = vcmp.eq.s32.totalorder %v270, 2
        %v274 = vstv %s268
        %v275 = vsel %vm273, %v274, 0.0
        %v276 = vstv %s256
        %v277 = vsel %vm272, %v276, %v275
        %v278 = vstv %s244
        %v279 = vsel %vm271, %v278, %v277
        %280 = vst [vmem:[%s223] sm:$0xff] %v279
        %s281 = sand.u32 %s100, 1
        %s282 = scalar_lea.sflag [#allocation4], %s281
        %s283 = sand.u32 %s100, 1
        %s284 = smul.addr %s283, 8
        %s285 = scalar_lea.vmem [#allocation7], %s284
        // Predicated region
        $region37: #{tpu_custom_call.1} parent=27 // pred_check
          %p286 = pneg %p110
        $region38: #{tpu_custom_call.1} parent=27 // pred_check_branch
          %288 = sbr.rel (%p286) target = $region40
        $region39: #{tpu_custom_call.1} parent=27 // pred_region
          %s290 = ssub.s32 128, 128
          %291 = vsyncadd %s282, %s290
          %s292 = sadd.s32 %s27, %s26
          %s293 = smul.addr %s292, 128
          %s294 = scalar_lea.hbm %s2, %s293
          %s296 = sshll.u32 %s285, 4
          %s297 = int_to_ptr.vmem [resolvable:$true] %s296
          %299 = dma.vmem_to_hbm [thread:$0]  %s297, 128, %s294, %s282
        $region40: #{tpu_custom_call.1} parent=27 // pred_fallthru
          _
      $region28: #{tpu_custom_call.1} parent=5 // pred_fallthru
        _
      %p300 = scmp.le.s32.totalorder 2, %s17
      // Predicated region
      $region41: #{tpu_custom_call.1} parent=5 // pred_check
        %p301 = pneg %p300
      $region42: #{tpu_custom_call.1} parent=5 // pred_check_branch
        %303 = sbr.rel (%p301) target = $region44
      $region43: #{tpu_custom_call.1} parent=5 // pred_region
        %s304 = ssub.s32 %s17, 2
        // Predicated region
        $region45: #{tpu_custom_call.1} parent=43 // pred_check
          %p305 = pneg %p116
        $region46: #{tpu_custom_call.1} parent=43 // pred_check_branch
          %307 = sbr.rel (%p305) target = $region48
        $region47: #{tpu_custom_call.1} parent=43 // pred_region
          %s308 = sand.u32 %s101, 1
          %s309 = scalar_lea.sflag [#allocation4], %s308
          %s310 = sand.u32 %s101, 1
          %s311 = smul.addr %s310, 8
          %s312 = scalar_lea.vmem [#allocation7], %s311
          %313 = dma.done %s309, 128
        $region48: #{tpu_custom_call.1} parent=43 // pred_fallthru
          _
      $region44: #{tpu_custom_call.1} parent=5 // pred_fallthru
        _
    $region6: #{tpu_custom_call.1} parent=1 // loop_footer
      %s21 = sadd.s32 1, %s17
    $region7: #{tpu_custom_call.1} parent=1 // loop_footer_branch
      %16 = sbr.rel target = $region3
    $region8: #{tpu_custom_call.1} parent=1 // loop_exit
      _
    %314 = vsyncpa [#allocation3], 1
    %s315 = scalar_lea.sflag [#allocation3], 1
    %316 = vsyncpa %s315, 1
    %317 = vsyncpa [#allocation6], 1
    %s318 = scalar_lea.sflag [#allocation6], 1
    %319 = vsyncpa %s318, 1
    %320 = vsyncpa [#allocation4], 1
    %s321 = scalar_lea.sflag [#allocation4], 1
    %322 = vsyncpa %s321, 1

</llo_original>
